<compile_context>
chip_gen: v7x
topology: tpu7x:2x2x1
jax: 0.10.0
libtpu: 0.0.40
codegen_flags: <defaults>
</compile_context>

<pallas_src>
import functools

import jax
import jax.numpy as jnp
from jax.experimental import pallas as pl
from jax.experimental.pallas import tpu as pltpu


def _round_up(x: int, m: int) -> int:
    return ((x + m - 1) // m) * m


def _fpn_predictor_kernel(x_ref, w_ref, b_ref, o_ref, *, compute_dtype):
    # x_ref: (TILE_N, C)       native dtype (f32) -> cast in-register
    # w_ref: (C, NC_PAD)       compute_dtype, lane-dense, resident in VMEM
    # b_ref: (1, NC_PAD)       f32
    # o_ref: (TILE_N, NC_PAD)
    x = x_ref[...].astype(compute_dtype)
    acc = jnp.dot(x, w_ref[...], preferred_element_type=jnp.float32)
    o_ref[...] = (acc + b_ref[...]).astype(o_ref.dtype)


def fpn_predictor_forward(
    x,
    weight,
    bias,
    *,
    tile_n=512,
    compute_dtype=jnp.bfloat16,
    use_pallas=None,
    return_padded_classes=False,
):
    """Forward pass of FPNPredictor.

    Args:
      x:      (N, C) or (N, C, 1, 1)
      weight: (num_classes, C)   -- nn.Linear convention
      bias:   (num_classes,)
    Returns:
      scores: (N, num_classes)   (or (N, nc_pad) if return_padded_classes)
    """
    if x.ndim == 4:
        assert x.shape[2] == 1 and x.shape[3] == 1, "expected (N, C, 1, 1)"
        x = x.reshape(x.shape[0], -1)

    n, c = x.shape
    num_classes = weight.shape[0]
    out_dtype = x.dtype

    # Problem-size gate: a standalone pallas_call costs ~µs of launch +
    # per-step overhead; below this the plain XLA dot wins on every gen.
    if use_pallas is None:
        use_pallas = (n * c * num_classes) >= (1 << 22)
    if not use_pallas:
        scores = (x @ weight.T + bias).astype(out_dtype)
        if return_padded_classes:
            pad = _round_up(num_classes, 128) - num_classes
            scores = jnp.pad(scores, ((0, 0), (0, pad)))
        return scores

    LANE = 128
    nc_pad = _round_up(num_classes, LANE)

    # ---- tile_n selection -------------------------------------------------
    # Multiple of 8 (f32 x block in VMEM); never bigger than needed.
    tile_n = _round_up(max(8, min(tile_n, _round_up(n, 8))), 8)
    # v7x: keep >=2 grid steps so the 'parallel' axis feeds both TensorCores.
    if n >= 512:
        tile_n = min(tile_n, max(256, _round_up(pl.cdiv(n, 2), 256)))

    # Conservative VMEM budget (fits v5e 16 MiB scoped default; v7x 32 MiB).
    x_itemsize = jnp.dtype(x.dtype).itemsize
    w_itemsize = jnp.dtype(compute_dtype).itemsize
    o_itemsize = jnp.dtype(out_dtype).itemsize

    def _vmem_bytes(tn):
        return (
            2 * tn * c * x_itemsize            # x tile, double-buffered
            + 2 * tn * nc_pad * o_itemsize     # out tile, double-buffered
            + 2 * c * nc_pad * w_itemsize      # weight (constant index_map)
            + 2 * nc_pad * 4                   # bias
        )

    VMEM_BUDGET = 12 * 1024 * 1024
    while tile_n > 8 and _vmem_bytes(tile_n) > VMEM_BUDGET:
        tile_n = max(8, _round_up(tile_n // 2, 8))

    grid_n = pl.cdiv(n, tile_n)

    # ---- parameter prep (one-time, tiny) -----------------------------------
    w_p = weight
    if nc_pad != num_classes:
        w_p = jnp.pad(w_p, ((0, nc_pad - num_classes), (0, 0)))
    w_p = w_p.T.astype(compute_dtype)          # (C, nc_pad), lane-dense

    b_p = bias.astype(jnp.float32).reshape(1, num_classes)
    if nc_pad != num_classes:
        b_p = jnp.pad(b_p, ((0, 0), (0, nc_pad - num_classes)))

    # ---- cost estimate: actual kernel traffic ------------------------------
    n_pad = grid_n * tile_n
    cost = pl.CostEstimate(
        flops=2 * n_pad * c * nc_pad,
        transcendentals=0,
        bytes_accessed=int(
            n_pad * c * x_itemsize             # x, native dtype as fed
            + c * nc_pad * w_itemsize          # weight
            + nc_pad * 4                       # bias
            + n_pad * nc_pad * o_itemsize      # padded output
        ),
    )

    kernel = functools.partial(_fpn_predictor_kernel, compute_dtype=compute_dtype)

    out = pl.pallas_call(
        kernel,
        out_shape=jax.ShapeDtypeStruct((n, nc_pad), out_dtype),
        grid=(grid_n,),
        in_specs=[
            # x: tiled along N; ragged last block masked by Pallas.
            pl.BlockSpec((tile_n, c), lambda i: (i, 0)),
            # weight / bias: constant block index -> resident in VMEM.
            pl.BlockSpec((c, nc_pad), lambda i: (0, 0)),
            pl.BlockSpec((1, nc_pad), lambda i: (0, 0)),
        ],
        out_specs=pl.BlockSpec((tile_n, nc_pad), lambda i: (i, 0)),
        compiler_params=pltpu.CompilerParams(
            dimension_semantics=("parallel",),
        ),
        cost_estimate=cost,
    )(x, w_p, b_p)

    if return_padded_classes:
        return out
    # Column slice only (no N padding exists); keep the in-kernel store
    # lane-dense and trim the padded classes here.
    return out[:, :num_classes]


if __name__ == "__main__":
    key = jax.random.PRNGKey(0)
    k_x, k_w = jax.random.split(key)

    # Small shapes consistent with the module: cfg.DATASETS.NUM_CLASSES and
    # in_channels (FPN box-head representation size).
    batch = 8
    in_channels = 128      # representation_size
    num_classes = 16

    # ROI-pooled features after the feature extractor: (N, C, 1, 1)
    x = jax.random.normal(k_x, (batch, in_channels, 1, 1), dtype=jnp.float32)

    # Deterministic parameter init matching __init__:
    #   cls_score.weight ~ Normal(0, 0.01), cls_score.bias = 0
    weight = 0.01 * jax.random.normal(
        k_w, (num_classes, in_channels), dtype=jnp.float32
    )
    bias = jnp.zeros((num_classes,), dtype=jnp.float32)

    # Force the Pallas path for the demo (the size gate would route this tiny
    # problem to plain XLA in production).
    scores = fpn_predictor_forward(x, weight, bias, use_pallas=True)
    scores = jax.block_until_ready(scores)

    # Reference check against plain JAX (f32); tolerance accounts for the
    # bf16 MXU operands with f32 accumulation.
    ref = x.reshape(batch, in_channels) @ weight.T + bias
    assert scores.shape == (batch, num_classes)
    assert scores.dtype == x.dtype
    assert jnp.allclose(scores, ref, atol=5e-3, rtol=5e-3), (
        float(jnp.max(jnp.abs(scores - ref)))
    )

    print("KERNEL_OK")
</pallas_src>

<mosaic_0001>
module attributes {stable_mosaic.version = 11 : i64} {
  func.func @_fpn_predictor_kernel(%arg0: i32, %arg1: memref<8x128xf32, #tpu.memory_space<vmem>>, %arg2: memref<128x128xbf16, #tpu.memory_space<vmem>>, %arg3: memref<1x128xf32, #tpu.memory_space<vmem>>, %arg4: memref<8x128xf32, #tpu.memory_space<vmem>>) attributes {dimension_semantics = [#tpu.dimension_semantics<parallel>], iteration_bounds = array<i64: 1>, scalar_prefetch = 0 : i64, scratch_operands = 0 : i64, tpu.core_type = #tpu.core_type<tc>, window_params = [{transform_indices = @transform_0, window_bounds = array<i64: 8, 128>}, {pipeline_mode = #tpu.pipeline_mode<synchronous>, transform_indices = @transform_1, window_bounds = array<i64: 128, 128>}, {pipeline_mode = #tpu.pipeline_mode<synchronous>, transform_indices = @transform_2, window_bounds = array<i64: 1, 128>}, {transform_indices = @transform_3, window_bounds = array<i64: 8, 128>}]} {
    %c0 = arith.constant 0 : index
    %c0_0 = arith.constant 0 : index
    %0 = vector.load %arg1[%c0, %c0_0] : memref<8x128xf32, #tpu.memory_space<vmem>>, vector<8x128xf32>
    %1 = arith.truncf %0 : vector<8x128xf32> to vector<8x128xbf16>
    %c0_1 = arith.constant 0 : index
    %c0_2 = arith.constant 0 : index
    %2 = vector.load %arg2[%c0_1, %c0_2] : memref<128x128xbf16, #tpu.memory_space<vmem>>, vector<128x128xbf16>
    %cst = arith.constant dense<0.000000e+00> : vector<8x128xf32>
    %3 = tpu.matmul %1, %2, %cst {dimension_numbers = #tpu.dot_dimension_numbers<[1], [0], [0], [1], [0, 0, 1, 1], [], []>} : vector<8x128xbf16>, vector<128x128xbf16>, vector<8x128xf32> -> vector<8x128xf32>
    %c0_3 = arith.constant 0 : index
    %c0_4 = arith.constant 0 : index
    %4 = vector.load %arg3[%c0_3, %c0_4] : memref<1x128xf32, #tpu.memory_space<vmem>>, vector<1x128xf32>
    %5 = vector.broadcast %4 : vector<1x128xf32> to vector<8x128xf32>
    %6 = arith.addf %3, %5 : vector<8x128xf32>
    %c0_5 = arith.constant 0 : index
    %c0_6 = arith.constant 0 : index
    %7 = vector.load %arg4[%c0_5, %c0_6] : memref<8x128xf32, #tpu.memory_space<vmem>>, vector<8x128xf32>
    tpu.vector_store %arg4[%c0_5, %c0_6], %6 {strides = array<i32>} : memref<8x128xf32, #tpu.memory_space<vmem>>, vector<8x128xf32>,
    return
  }
  func.func @transform_0(%arg0: i32) -> (i32, i32) {
    %c0_i32 = arith.constant 0 : i32
    %c0_i32_0 = arith.constant 0 : i32
    return %arg0, %c0_i32 : i32, i32
  }
  func.func @transform_1(%arg0: i32) -> (i32, i32) {
    %c0_i32 = arith.constant 0 : i32
    %c0_i32_0 = arith.constant 0 : i32
    %c0_i32_1 = arith.constant 0 : i32
    return %c0_i32, %c0_i32_0 : i32, i32
  }
  func.func @transform_2(%arg0: i32) -> (i32, i32) {
    %c0_i32 = arith.constant 0 : i32
    %c0_i32_0 = arith.constant 0 : i32
    %c0_i32_1 = arith.constant 0 : i32
    return %c0_i32, %c0_i32_0 : i32, i32
  }
  func.func @transform_3(%arg0: i32) -> (i32, i32) {
    %c0_i32 = arith.constant 0 : i32
    %c0_i32_0 = arith.constant 0 : i32
    return %arg0, %c0_i32 : i32, i32
  }
}

</mosaic_0001>

<llo_original>
// kernel: tpu_custom_call.1
$region0: #{tpu_custom_call.1}
  #allocation0 [shape = 'u32[]', space=smem, size = 0x4, offset = 0x4, fixed_abs, tag = 'smem constant byte address 0x4 - core index']
  #allocation1 [shape = 'u32[144,128]{1,0:T(1,128)}', space=vmem, size = 0x12000, scoped, tag = 'internal scratch']
  %s0 = inlined_call_operand.hbm [shape: f32[8,128], index: 0, kind: input, shape index: {}]
  %s1 = inlined_call_operand.hbm [shape: bf16[128,128], index: 1, kind: input, shape index: {}]
  %s2 = inlined_call_operand.vmem [shape: f32[1,128], index: 2, kind: input, shape index: {}]
  %s3 = inlined_call_operand.hbm [shape: f32[8,128], index: 3, kind: output, shape index: {}]
  %s4 = sld [smem:[#allocation0]]
  $region30: #{tpu_custom_call.1} parent=0
    _
  %s6 = ssub.s32 1, %s4
  %s7 = scalar_select 0, %s6, %s4
  $region1: #{tpu_custom_call.1} parent=0
    #allocation2 [shape = 'u8[4096]{0}', space=vmem, size = 0x1000, scoped, tag = 'input window, operand 0, single buffered']
    #allocation3 [shape = 's32[1]{0}', space=sflag, size = 0x4, scoped, tag = 'scoped memory for tpu_custom_call.1']
    #allocation4 [shape = 's32[1]{0}', space=sflag, size = 0x4, scoped, tag = 'scoped memory for tpu_custom_call.1']
    #allocation5 [shape = 'u8[32768]{0}', space=vmem, size = 0x8000, scoped, tag = 'input window, operand 1, single buffered']
    #allocation6 [shape = 's32[1]{0}', space=sflag, size = 0x4, scoped, tag = 'scoped memory for tpu_custom_call.1']
    #allocation7 [shape = 'u8[4096]{0}', space=vmem, size = 0x1000, scoped, tag = 'output window, operand 0, single buffered']
    %8 = vsyncpa [#allocation3], 0
    %9 = vsyncpa [#allocation6], 0
    %10 = vsyncpa [#allocation4], 0
    // Predicated region
    $region2: #{tpu_custom_call.1} parent=1 // pred_check
      _
    $region3: #{tpu_custom_call.1} parent=1 // pred_check_branch
      %12 = sbr.rel (0) target = $region5
    $region4: #{tpu_custom_call.1} parent=1 // pred_region
      %s14 = ssub.s32 128, 128
      %15 = vsyncadd [#allocation3], %s14
      %s17 = sshll.u32 [#allocation2], 4
      %s18 = int_to_ptr.vmem [resolvable:$true] %s17
      %20 = dma.hbm_to_vmem [thread:$0]  %s0, 128, %s18, [#allocation3]
    $region5: #{tpu_custom_call.1} parent=1 // pred_fallthru
      _
    // Predicated region
    $region6: #{tpu_custom_call.1} parent=1 // pred_check
      _
    $region7: #{tpu_custom_call.1} parent=1 // pred_check_branch
      %22 = sbr.rel (0) target = $region9
    $region8: #{tpu_custom_call.1} parent=1 // pred_region
      %s24 = ssub.s32 1024, 1024
      %25 = vsyncadd [#allocation6], %s24
      %s26 = sshll.u32 [#allocation5], 4
      %s27 = int_to_ptr.vmem [resolvable:$true] %s26
      %32 = dma.hbm_to_vmem [thread:$0]  %s1, 1024, %s27, [#allocation6], 64, 64, 4
    $region9: #{tpu_custom_call.1} parent=1 // pred_fallthru
      _
    // Predicated region
    $region10: #{tpu_custom_call.1} parent=1 // pred_check
      _
    $region11: #{tpu_custom_call.1} parent=1 // pred_check_branch
      %34 = sbr.rel (0) target = $region13
    $region12: #{tpu_custom_call.1} parent=1 // pred_region
      _
    $region13: #{tpu_custom_call.1} parent=1 // pred_fallthru
      _
    // Predicated region
    $region14: #{tpu_custom_call.1} parent=1 // pred_check
      _
    $region15: #{tpu_custom_call.1} parent=1 // pred_check_branch
      %36 = sbr.rel (0) target = $region17
    $region16: #{tpu_custom_call.1} parent=1 // pred_region
      %37 = dma.done [#allocation3], 128
    $region17: #{tpu_custom_call.1} parent=1 // pred_fallthru
      _
    // Predicated region
    $region18: #{tpu_custom_call.1} parent=1 // pred_check
      _
    $region19: #{tpu_custom_call.1} parent=1 // pred_check_branch
      %39 = sbr.rel (0) target = $region21
    $region20: #{tpu_custom_call.1} parent=1 // pred_region
      %40 = dma.done [#allocation6], 1024
    $region21: #{tpu_custom_call.1} parent=1 // pred_fallthru
      _
    %v42 = vld [vmem:[#allocation2] sm:$0xff]
    %v43 = vpack.c.bf16 %v42, %v42
    %v44 = vld [vmem:[#allocation5] sm:$0xf]
    %v45 = vld [vmem:[#allocation5 + $0x4] sm:$0xf]
    %v46 = vld [vmem:[#allocation5 + $0x8] sm:$0xf]
    %v47 = vld [vmem:[#allocation5 + $0xc] sm:$0xf]
    %v48 = vld [vmem:[#allocation5 + $0x10] sm:$0xf]
    %v49 = vld [vmem:[#allocation5 + $0x14] sm:$0xf]
    %v50 = vld [vmem:[#allocation5 + $0x18] sm:$0xf]
    %v51 = vld [vmem:[#allocation5 + $0x1c] sm:$0xf]
    %v52 = vld [vmem:[#allocation5 + $0x20] sm:$0xf]
    %v53 = vld [vmem:[#allocation5 + $0x24] sm:$0xf]
    %v54 = vld [vmem:[#allocation5 + $0x28] sm:$0xf]
    %v55 = vld [vmem:[#allocation5 + $0x2c] sm:$0xf]
    %v56 = vld [vmem:[#allocation5 + $0x30] sm:$0xf]
    %v57 = vld [vmem:[#allocation5 + $0x34] sm:$0xf]
    %v58 = vld [vmem:[#allocation5 + $0x38] sm:$0xf]
    %v59 = vld [vmem:[#allocation5 + $0x3c] sm:$0xf]
    %v60 = vld [vmem:[%s2] sm:$0x1]
    %v62 = vlaneseq
    %v63 = vshrl.u32 %v62, 7
    %v64 = vsub.s32 0, %v63
    %v65 = vrot.slane %v60, %v64
    %v83 = vunpack.c.l.b16 %v44
    %v84 = vunpack.c.l.b16 %v45
    %v85 = vunpack.c.l.b16 %v46
    %v86 = vunpack.c.l.b16 %v47
    %v87 = vunpack.c.l.b16 %v48
    %v88 = vunpack.c.l.b16 %v49
    %v89 = vunpack.c.l.b16 %v50
    %v90 = vunpack.c.l.b16 %v51
    %v91 = vunpack.c.l.b16 %v52
    %v92 = vunpack.c.l.b16 %v53
    %v93 = vunpack.c.l.b16 %v54
    %v94 = vunpack.c.l.b16 %v55
    %v95 = vunpack.c.l.b16 %v56
    %v96 = vunpack.c.l.b16 %v57
    %v97 = vunpack.c.l.b16 %v58
    %v98 = vunpack.c.l.b16 %v59
    %v99 = vpack.c.b16 %v84, %v83
    %v100 = vpack.c.b16 %v86, %v85
    %v101 = vpack.c.b16 %v88, %v87
    %v102 = vpack.c.b16 %v90, %v89
    %v103 = vpack.c.b16 %v92, %v91
    %v104 = vpack.c.b16 %v94, %v93
    %v105 = vpack.c.b16 %v96, %v95
    %v106 = vpack.c.b16 %v98, %v97
    %115 = vmatprep.subr.bf16.mxu0 0
    %116 = vmatpush1.bf16.msra.mxu0 %v99
    %117 = vmatprep.subr.bf16.mxu0 0
    %118 = vmatpush1.bf16.msra.mxu0 %v100
    %119 = vmatprep.subr.bf16.mxu0 0
    %120 = vmatpush1.bf16.msra.mxu0 %v101
    %121 = vmatprep.subr.bf16.mxu0 0
    %122 = vmatpush1.bf16.msra.mxu0 %v102
    %123 = vmatprep.subr.bf16.mxu0 0
    %124 = vmatpush1.bf16.msra.mxu0 %v103
    %125 = vmatprep.subr.bf16.mxu0 0
    %126 = vmatpush1.bf16.msra.mxu0 %v104
    %127 = vmatprep.subr.bf16.mxu0 0
    %128 = vmatpush1.bf16.msra.mxu0 %v105
    %129 = vmatprep.subr.bf16.mxu0 0
    %130 = vmatpush1.bf16.msra.mxu0 %v106
    %131 = vmatprep.subr.bf16.mxu0 0
    %132 = vmatpush1.bf16.msra.mxu0 0
    %133 = vmatprep.subr.bf16.mxu0 0
    %134 = vmatpush1.bf16.msra.mxu0 0
    %135 = vmatprep.subr.bf16.mxu0 0
    %136 = vmatpush1.bf16.msra.mxu0 0
    %137 = vmatprep.subr.bf16.mxu0 0
    %138 = vmatpush1.bf16.msra.mxu0 0
    %139 = vmatprep.subr.bf16.mxu0 0
    %140 = vmatpush1.bf16.msra.mxu0 0
    %141 = vmatprep.subr.bf16.mxu0 0
    %142 = vmatpush1.bf16.msra.mxu0 0
    %143 = vmatprep.subr.bf16.mxu0 0
    %144 = vmatpush1.bf16.msra.mxu0 0
    %145 = vmatprep.subr.bf16.mxu0 0
    %146 = vmatpush1.bf16.msra.mxu0 0
    %147 = vmatprep.mubr.bf16.mxu0 0
    %148 = vmatmul.mubr.bf16.gmra.mrb[0].mxu0 %v43
    %v149 = vpop.f32.mrb[0].mxu0
    %v150 = vadd.f32 %v65, %v149
    %v151 = vpop.f32.mrb[0].mxu0
    %v152 = vpop.f32.mrb[0].mxu0
    %v153 = vpop.f32.mrb[0].mxu0
    %154 = vdwg.mxu0
    %155 = vst [vmem:[#allocation7] sm:$0xff] %v150
    // Predicated region
    $region22: #{tpu_custom_call.1} parent=1 // pred_check
      _
    $region23: #{tpu_custom_call.1} parent=1 // pred_check_branch
      %157 = sbr.rel (0) target = $region25
    $region24: #{tpu_custom_call.1} parent=1 // pred_region
      %s159 = ssub.s32 128, 128
      %160 = vsyncadd [#allocation4], %s159
      %s162 = sshll.u32 [#allocation7], 4
      %s163 = int_to_ptr.vmem [resolvable:$true] %s162
      %165 = dma.vmem_to_hbm [thread:$0]  %s163, 128, %s3, [#allocation4]
    $region25: #{tpu_custom_call.1} parent=1 // pred_fallthru
      _
    // Predicated region
    $region26: #{tpu_custom_call.1} parent=1 // pred_check
      _
    $region27: #{tpu_custom_call.1} parent=1 // pred_check_branch
      %167 = sbr.rel (0) target = $region29
    $region28: #{tpu_custom_call.1} parent=1 // pred_region
      %168 = dma.done [#allocation4], 128
    $region29: #{tpu_custom_call.1} parent=1 // pred_fallthru
      _
    %169 = vsyncpa [#allocation3], 1
    %170 = vsyncpa [#allocation6], 1
    %171 = vsyncpa [#allocation4], 1

</llo_original>
